<compile_context>
chip_gen: v7x
topology: tpu7x:2x2x1
jax: 0.10.0
libtpu: 0.0.40
codegen_flags: <defaults>
</compile_context>

<pallas_src>
import functools

import jax
import jax.numpy as jnp
from jax.experimental import pallas as pl
from jax.experimental.pallas import tpu as pltpu


def _pool_expand_kernel(x_ref, q_ref, o_ref, *, inv_area, expand_ratio):
    # x_ref: (1, tr, K)          K = g*s*Wc   packed input rows
    # q_ref: (K, C)              C = g*Wo     block-diagonal 0/1 pooling matrix
    # o_ref: (E, tr, C)          E = expand_ratio, final layout incl. zero chans
    acc = jnp.dot(x_ref[0], q_ref[...], preferred_element_type=jnp.float32)
    pooled = (acc * inv_area).astype(o_ref.dtype)
    o_ref[0] = pooled
    if expand_ratio > 1:
        zeros = jnp.zeros_like(pooled)
        for e in range(1, expand_ratio):
            o_ref[e] = zeros


def _pick_pack(ch_rows, w_out, lane=128):
    """Packing factor g (a divisor of ch_rows = nIn*Ho).

    Aims for a lane-dense (>=128-wide) kernel output without inflating the
    block-diagonal pooling matrix / MXU work by more than ~2x.
    """
    if w_out >= lane:
        return 1
    divs = [d for d in range(1, ch_rows + 1) if ch_rows % d == 0]
    dense = [d for d in divs if lane <= d * w_out <= 2 * lane]
    if dense:
        return min(dense)
    under = [d for d in divs if d * w_out <= lane]  # always contains 1
    return max(under)


def downsample(x, n_out, stride):
    """Pallas equivalent of Downsample(nIn, nOut, stride).forward(x), x is NCHW."""
    n, n_in, h, w = x.shape
    assert n_out % n_in == 0, "nOut must be a multiple of nIn"
    e_ratio = n_out // n_in
    s = int(stride)
    h_out, w_out = h // s, w // s  # AvgPool2d(stride): kernel=stride, floor output
    dtype = x.dtype

    # Degenerate spatial case: AvgPool output has zero extent -> all zeros.
    if h_out == 0 or w_out == 0:
        return jnp.zeros((n, n_out, h_out, w_out), dtype)

    # Floor semantics: drop trailing rows/cols not covered by a full window
    # (rare path; no-op when stride divides H and W).
    hc, wc = h_out * s, w_out * s
    if hc != h or wc != w:
        x = x[:, :, :hc, :wc]

    # ---- row packing: g pooled rows per kernel row -> lane-dense output ----
    ch_rows = n_in * h_out            # pooled rows per image, (c, ho) order
    g = _pick_pack(ch_rows, w_out)
    r_rows = ch_rows // g             # packed rows per image
    k_dim = g * s * wc                # contraction width (lane-dense input)
    c_dim = g * w_out                 # output lane width (~128 when possible)

    # Block-diagonal separable pooling matrix Q (exact 0/1 entries in any
    # dtype; the 1/s^2 mean scale is applied on the f32 accumulator).
    #   Q[p*s*Wc + i*Wc + w, p*Wo + wo] = 1 iff w // s == wo
    qw = (jnp.arange(wc)[:, None] // s) == jnp.arange(w_out)[None, :]   # (Wc, Wo)
    qw = jnp.tile(qw, (s, 1))                                           # (s*Wc, Wo)
    eye_g = jnp.eye(g, dtype=bool)
    q = (eye_g[:, None, :, None] & qw[None, :, None, :]) \
        .reshape(k_dim, c_dim).astype(dtype)

    # Zero-cost views of contiguous NCHW memory.
    x3 = x.reshape(n, r_rows, k_dim)

    # ---- generation-aware VMEM budget & row-block size --------------------
    itemsize = jnp.dtype(dtype).itemsize
    try:
        vmem_cap = int(getattr(pltpu.get_tpu_info(), "vmem_capacity_bytes", 0)) \
            or (64 << 20)
    except Exception:                       # no info available -> be conservative
        vmem_cap = 64 << 20                 # v7x physical size
    vmem_budget = (vmem_cap * 3) // 4       # ~48 MiB v7x, ~96 MiB v5e/v6e

    q_bytes = 2 * k_dim * c_dim * itemsize                       # Q (dbl-buffered bound)
    per_row_bytes = 2 * (k_dim + e_ratio * c_dim) * itemsize     # dbl-buffered in + out
    avail = vmem_budget - q_bytes - (2 << 20)                    # compiler-scratch headroom

    sub = max(8, 32 // itemsize)            # sublane packing: 8 f32 / 16 bf16 / 32 int8
    min_rows = min(r_rows, sub)
    if avail < per_row_bytes * min_rows:
        # No silent fallback: this shape needs K-tiling with an accumulator.
        raise ValueError(
            "Downsample pallas kernel: one row-block "
            f"(K={k_dim}, E*C={e_ratio * c_dim}, dtype={dtype}) does not fit "
            f"the VMEM budget ({vmem_budget} bytes); tile the contraction axis "
            "with an accumulator scratch to support this shape."
        )

    tr_cap = avail // per_row_bytes
    if r_rows <= tr_cap:
        tr = r_rows
    else:
        tr = int((tr_cap // sub) * sub)     # multiple of the sublane packing

    # v7x megacore: keep >=2 parallel grid steps when the batch axis alone
    # would give a single-step grid.
    if n == 1 and tr >= r_rows and r_rows > sub:
        half = (r_rows + 1) // 2
        tr = min(((half + sub - 1) // sub) * sub, r_rows)

    grid = (n, pl.cdiv(r_rows, tr))
    kernel = functools.partial(
        _pool_expand_kernel, inv_area=1.0 / float(s * s), expand_ratio=e_ratio
    )

    out3 = pl.pallas_call(
        kernel,
        out_shape=jax.ShapeDtypeStruct((n * e_ratio, r_rows, c_dim), dtype),
        grid_spec=pltpu.PrefetchScalarGridSpec(
            num_scalar_prefetch=0,
            grid=grid,
            in_specs=[
                pl.BlockSpec((1, tr, k_dim), lambda ni, ri: (ni, ri, 0)),
                # Constant-index block: the pipeline skips redundant re-fetches;
                # Q is tiny so default buffering is fine.
                pl.BlockSpec((k_dim, c_dim), lambda ni, ri: (0, 0)),
            ],
            out_specs=pl.BlockSpec(
                (e_ratio, tr, c_dim), lambda ni, ri: (ni, ri, 0)
            ),
        ),
        compiler_params=pltpu.CompilerParams(
            dimension_semantics=("parallel", "parallel"),
            vmem_limit_bytes=int(vmem_budget),
        ),
    )(x3, q)

    # (N*E, R, C) is exactly the row-major layout of (N, nOut, Ho, Wo).
    return out3.reshape(n, n_out, h_out, w_out)


def _reference(x, n_out, stride):
    """Plain-JAX reference matching PyTorch semantics (for verification)."""
    n, n_in, h, w = x.shape
    s = stride
    h_out, w_out = h // s, w // s
    xt = x[:, :, : h_out * s, : w_out * s]
    pooled = xt.reshape(n, n_in, h_out, s, w_out, s).mean(axis=(3, 5))
    zeros = jnp.zeros((n, n_out - n_in, h_out, w_out), x.dtype)
    return jnp.concatenate([pooled, zeros], axis=1)


if __name__ == "__main__":
    # Module config: Downsample(nIn=4, nOut=8, stride=2) -> expand_ratio = 2
    n_in, n_out, stride = 4, 8, 2

    key = jax.random.PRNGKey(0)
    x = jax.random.normal(key, (2, n_in, 16, 16), dtype=jnp.float32)

    out = jax.block_until_ready(downsample(x, n_out, stride))

    ref = _reference(x, n_out, stride)
    assert out.shape == (2, n_out, 8, 8), out.shape
    assert jnp.allclose(out, ref, atol=1e-5, rtol=1e-5), "mismatch vs reference"

    print("KERNEL_OK")
</pallas_src>

<mosaic_0001>
module attributes {stable_mosaic.version = 11 : i64} {
  func.func @_pool_expand_kernel(%arg0: i32, %arg1: i32, %arg2: memref<1x2x512xf32, #tpu.memory_space<vmem>>, %arg3: memref<512x128xf32, #tpu.memory_space<vmem>>, %arg4: memref<2x2x128xf32, #tpu.memory_space<vmem>>) attributes {dimension_semantics = [#tpu.dimension_semantics<parallel>, #tpu.dimension_semantics<parallel>], iteration_bounds = array<i64: 2, 1>, scalar_prefetch = 0 : i64, scratch_operands = 0 : i64, tpu.core_type = #tpu.core_type<tc>, window_params = [{transform_indices = @transform_0, window_bounds = array<i64: 1, 2, 512>}, {pipeline_mode = #tpu.pipeline_mode<synchronous>, transform_indices = @transform_1, window_bounds = array<i64: 512, 128>}, {transform_indices = @transform_2, window_bounds = array<i64: 2, 2, 128>}]} {
    %c0 = arith.constant 0 : index
    %c0_0 = arith.constant 0 : index
    %c0_1 = arith.constant 0 : index
    %0 = vector.load %arg2[%c0, %c0_0, %c0_1] : memref<1x2x512xf32, #tpu.memory_space<vmem>>, vector<1x2x512xf32>
    %1 = vector.shape_cast %0 : vector<1x2x512xf32> to vector<2x512xf32>
    %c0_2 = arith.constant 0 : index
    %c0_3 = arith.constant 0 : index
    %2 = vector.load %arg3[%c0_2, %c0_3] : memref<512x128xf32, #tpu.memory_space<vmem>>, vector<512x128xf32>
    %cst = arith.constant dense<0.000000e+00> : vector<2x128xf32>
    %3 = tpu.matmul %1, %2, %cst {dimension_numbers = #tpu.dot_dimension_numbers<[1], [0], [0], [1], [0, 0, 1, 1], [], []>} : vector<2x512xf32>, vector<512x128xf32>, vector<2x128xf32> -> vector<2x128xf32>
    %cst_4 = arith.constant 2.500000e-01 : f32
    %4 = vector.broadcast %cst_4 : f32 to vector<2x128xf32>
    %5 = arith.mulf %3, %4 : vector<2x128xf32>
    %c0_5 = arith.constant 0 : index
    %c0_6 = arith.constant 0 : index
    %c0_7 = arith.constant 0 : index
    %6 = vector.load %arg4[%c0_5, %c0_6, %c0_7] : memref<2x2x128xf32, #tpu.memory_space<vmem>>, vector<1x2x128xf32>
    %7 = vector.shape_cast %6 : vector<1x2x128xf32> to vector<2x128xf32>
    %8 = vector.shape_cast %5 : vector<2x128xf32> to vector<1x2x128xf32>
    tpu.vector_store %arg4[%c0_5, %c0_6, %c0_7], %8 {strides = array<i32>} : memref<2x2x128xf32, #tpu.memory_space<vmem>>, vector<1x2x128xf32>,
    %cst_8 = arith.constant 0.000000e+00 : f32
    %9 = vector.broadcast %cst_8 : f32 to vector<2x128xf32>
    %c1 = arith.constant 1 : index
    %c0_9 = arith.constant 0 : index
    %c0_10 = arith.constant 0 : index
    %10 = vector.load %arg4[%c1, %c0_9, %c0_10] : memref<2x2x128xf32, #tpu.memory_space<vmem>>, vector<1x2x128xf32>
    %11 = vector.shape_cast %10 : vector<1x2x128xf32> to vector<2x128xf32>
    %12 = vector.shape_cast %9 : vector<2x128xf32> to vector<1x2x128xf32>
    tpu.vector_store %arg4[%c1, %c0_9, %c0_10], %12 {strides = array<i32>} : memref<2x2x128xf32, #tpu.memory_space<vmem>>, vector<1x2x128xf32>,
    return
  }
  func.func @transform_0(%arg0: i32, %arg1: i32) -> (i32, i32, i32) {
    %c0_i32 = arith.constant 0 : i32
    %c0_i32_0 = arith.constant 0 : i32
    return %arg0, %arg1, %c0_i32 : i32, i32, i32
  }
  func.func @transform_1(%arg0: i32, %arg1: i32) -> (i32, i32) {
    %c0_i32 = arith.constant 0 : i32
    %c0_i32_0 = arith.constant 0 : i32
    %c0_i32_1 = arith.constant 0 : i32
    return %c0_i32, %c0_i32_0 : i32, i32
  }
  func.func @transform_2(%arg0: i32, %arg1: i32) -> (i32, i32, i32) {
    %c0_i32 = arith.constant 0 : i32
    %c0_i32_0 = arith.constant 0 : i32
    return %arg0, %arg1, %c0_i32 : i32, i32, i32
  }
}

</mosaic_0001>

<llo_original>
// kernel: tpu_custom_call.1
$region0: #{tpu_custom_call.1}
  #allocation0 [shape = 'u32[]', space=smem, size = 0x4, offset = 0x4, fixed_abs, tag = 'smem constant byte address 0x4 - core index']
  #allocation1 [shape = 'u32[144,128]{1,0:T(1,128)}', space=vmem, size = 0x12000, scoped, tag = 'internal scratch']
  %s0 = inlined_call_operand.hbm [shape: f32[2,2,512], index: 0, kind: input, shape index: {}]
  %s1 = inlined_call_operand.hbm [shape: f32[512,128], index: 1, kind: input, shape index: {}]
  %s2 = inlined_call_operand.hbm [shape: f32[4,2,128], index: 2, kind: output, shape index: {}]
  %s3 = sld [smem:[#allocation0]]
  $region49: #{tpu_custom_call.1} parent=0
    _
  %s5 = ssub.s32 1, %s3
  %s6 = scalar_select 0, %s5, %s3
  $region1: #{tpu_custom_call.1} parent=0
    #allocation2 [shape = 'u8[8192]{0}', space=vmem, size = 0x2000, scoped, tag = 'input window, operand 0']
    #allocation3 [shape = 's32[2]{0}', space=sflag, size = 0x8, scoped, tag = 'scoped memory for tpu_custom_call.1']
    #allocation4 [shape = 's32[2]{0}', space=sflag, size = 0x8, scoped, tag = 'scoped memory for tpu_custom_call.1']
    #allocation5 [shape = 'u8[262144]{0}', space=vmem, size = 0x40000, scoped, tag = 'input window, operand 1, single buffered']
    #allocation6 [shape = 's32[1]{0}', space=sflag, size = 0x4, scoped, tag = 'scoped memory for tpu_custom_call.1']
    #allocation7 [shape = 'u8[4096]{0}', space=vmem, size = 0x1000, scoped, tag = 'output window, operand 0']
    %7 = vsyncpa [#allocation3], 0
    %s8 = scalar_lea.sflag [#allocation3], 1
    %9 = vsyncpa %s8, 0
    %10 = vsyncpa [#allocation6], 0
    %11 = vsyncpa [#allocation4], 0
    %s12 = scalar_lea.sflag [#allocation4], 1
    %13 = vsyncpa %s12, 0
    loop: start=0, step=1, limit=4
    $region2: #{tpu_custom_call.1} parent=1 // loop_pre_header
      _
    $region3: #{tpu_custom_call.1} parent=1 // loop_header
      %s15 = sphi 0, %s19
      %p16 = scmp.ge.s32.totalorder %s15, 4
      %s22 = sphi 0, %s34
      %s23 = sphi 0, %s30
      %s24 = sphi 0, %s22
      %s25 = sphi 0, %s23
      %s26 = sphi 0, %s24
      %s27 = sphi 0, %s25
      %s39 = sphi 0, %s41
      %s42 = sphi 0, %s39
      %s43 = sphi 0, %s42
      %s59 = sphi 0, %s43
      %s63 = sphi 0, %s63
      %s65 = sphi 0, %s63
      %s66 = sphi 0, %s65
      %s80 = sphi 0, %s66
      %s88 = sphi 0, %s90
      %s91 = sphi 0, %s88
      %s92 = sphi 0, %s91
      %s108 = sphi 0, %s92
    $region4: #{tpu_custom_call.1} parent=1 // loop_header_branch
      %18 = sbr.rel (%p16) target = $region8
    $region5: #{tpu_custom_call.1} parent=1 // loop_body
      %s20 = ssub.s32 %s15, 1
      %s21 = ssub.s32 %s15, 2
      %s28 = sadd.s32 1, %s23
      %p29 = scmp.ge.s32.totalorder %s28, 1
      %s30 = scalar_select %p29, 0, %s28
      %s31 = sadd.s32 1, %s22
      %s32 = scalar_select %p29, %s31, %s22
      %p33 = scmp.ge.s32.totalorder %s32, 2
      %s34 = scalar_select %p33, 0, %s32
      %s35 = ssub.s32 %s22, %s34
      %s36 = ssub.s32 %s23, %s30
      %s37 = sor.u32 %s35, %s36
      %p38 = scmp.eq.s32.totalorder %s37, 0
      %s40 = sadd.s32 %s39, 1
      %s41 = scalar_select %p38, %s39, %s40
      %p44 = pneg %p38
      %p45 = scmp.eq.s32.totalorder %s15, 1
      %p46 = por %p44, %p45
      %p47 = scmp.ne.s32.totalorder %s39, %s42
      %p48 = scmp.eq.s32.totalorder %s15, 0
      %p49 = por %p47, %p48
      %p50 = scmp.ne.s32.totalorder %s39, %s42
      %p51 = scmp.eq.s32.totalorder %s20, 1
      %p52 = por %p50, %p51
      %p53 = scmp.ne.s32.totalorder %s42, %s43
      %p54 = scmp.eq.s32.totalorder %s20, 0
      %p55 = por %p53, %p54
      %p56 = scmp.ne.s32.totalorder %s42, %s43
      %p57 = scmp.eq.s32.totalorder %s21, 1
      %p58 = por %p56, %p57
      %p60 = scmp.ne.s32.totalorder %s43, %s59
      %p61 = scmp.eq.s32.totalorder %s21, 0
      %p62 = por %p60, %p61
      %s64 = sadd.s32 %s63, 1
      %p67 = scmp.eq.s32.totalorder %s15, 1
      %p68 = scmp.ne.s32.totalorder %s63, %s65
      %p69 = scmp.eq.s32.totalorder %s15, 0
      %p70 = por %p68, %p69
      %p71 = scmp.ne.s32.totalorder %s63, %s65
      %p72 = scmp.eq.s32.totalorder %s20, 1
      %p73 = por %p71, %p72
      %p74 = scmp.ne.s32.totalorder %s65, %s66
      %p75 = scmp.eq.s32.totalorder %s20, 0
      %p76 = por %p74, %p75
      %p77 = scmp.ne.s32.totalorder %s65, %s66
      %p78 = scmp.eq.s32.totalorder %s21, 1
      %p79 = por %p77, %p78
      %p81 = scmp.ne.s32.totalorder %s66, %s80
      %p82 = scmp.eq.s32.totalorder %s21, 0
      %p83 = por %p81, %p82
      %s84 = ssub.s32 %s22, %s34
      %s85 = ssub.s32 %s23, %s30
      %s86 = sor.u32 %s84, %s85
      %p87 = scmp.eq.s32.totalorder %s86, 0
      %s89 = sadd.s32 %s88, 1
      %s90 = scalar_select %p87, %s88, %s89
      %p93 = pneg %p87
      %p94 = scmp.eq.s32.totalorder %s15, 1
      %p95 = por %p93, %p94
      %p96 = scmp.ne.s32.totalorder %s88, %s91
      %p97 = scmp.eq.s32.totalorder %s15, 0
      %p98 = por %p96, %p97
      %p99 = scmp.ne.s32.totalorder %s88, %s91
      %p100 = scmp.eq.s32.totalorder %s20, 1
      %p101 = por %p99, %p100
      %p102 = scmp.ne.s32.totalorder %s91, %s92
      %p103 = scmp.eq.s32.totalorder %s20, 0
      %p104 = por %p102, %p103
      %p105 = scmp.ne.s32.totalorder %s91, %s92
      %p106 = scmp.eq.s32.totalorder %s21, 1
      %p107 = por %p105, %p106
      %p109 = scmp.ne.s32.totalorder %s92, %s108
      %p110 = scmp.eq.s32.totalorder %s21, 0
      %p111 = por %p109, %p110
      %p112 = scmp.le.s32.totalorder 1, %s15
      %p113 = scmp.lt.s32.totalorder %s15, 3
      %p114 = pnand %p112, %p113
      %p115 = pneg %p114
      // Predicated region
      $region9: #{tpu_custom_call.1} parent=5 // pred_check
        _
      $region10: #{tpu_custom_call.1} parent=5 // pred_check_branch
        %117 = sbr.rel (%p114) target = $region12
      $region11: #{tpu_custom_call.1} parent=5 // pred_region
        %s118 = ssub.s32 %s15, 1
        // Predicated region
        $region13: #{tpu_custom_call.1} parent=11 // pred_check
          %p119 = pneg %p76
        $region14: #{tpu_custom_call.1} parent=11 // pred_check_branch
          %121 = sbr.rel (%p119) target = $region16
        $region15: #{tpu_custom_call.1} parent=11 // pred_region
          %s123 = ssub.s32 8192, 8192
          %124 = vsyncadd [#allocation6], %s123
          %s125 = sshll.u32 [#allocation5], 4
          %s126 = int_to_ptr.vmem [resolvable:$true] %s125
          %131 = dma.hbm_to_vmem [thread:$0]  %s1, 8192, %s126, [#allocation6], 128, 128, 8
        $region16: #{tpu_custom_call.1} parent=11 // pred_fallthru
          _
      $region12: #{tpu_custom_call.1} parent=5 // pred_fallthru
        _
      %p132 = scmp.lt.s32.totalorder %s15, 2
      // Predicated region
      $region17: #{tpu_custom_call.1} parent=5 // pred_check
        %p133 = pneg %p132
      $region18: #{tpu_custom_call.1} parent=5 // pred_check_branch
        %135 = sbr.rel (%p133) target = $region20
      $region19: #{tpu_custom_call.1} parent=5 // pred_region
        // Predicated region
        $region21: #{tpu_custom_call.1} parent=19 // pred_check
          %p136 = pneg %p49
        $region22: #{tpu_custom_call.1} parent=19 // pred_check_branch
          %138 = sbr.rel (%p136) target = $region24
        $region23: #{tpu_custom_call.1} parent=19 // pred_region
          %s139 = sand.u32 %s39, 1
          %s140 = scalar_lea.sflag [#allocation3], %s139
          %s141 = sand.u32 %s39, 1
          %s142 = smul.addr %s141, 8
          %s143 = scalar_lea.vmem [#allocation2], %s142
          %s145 = ssub.s32 128, 128
          %146 = vsyncadd %s140, %s145
          %s147 = smul.addr %s23, 4
          %s148 = smul.addr %s22, 4
          %s149 = sadd.s32 %s147, %s148
          %s150 = smul.addr %s149, 32
          %s151 = scalar_lea.hbm %s0, %s150
          %s153 = sshll.u32 %s143, 4
          %s154 = int_to_ptr.vmem [resolvable:$true] %s153
          %156 = dma.hbm_to_vmem [thread:$0]  %s151, 128, %s154, %s140
        $region24: #{tpu_custom_call.1} parent=19 // pred_fallthru
          _
      $region20: #{tpu_custom_call.1} parent=5 // pred_fallthru
        _
      %p157 = scmp.le.s32.totalorder 1, %s15
      %p158 = scmp.lt.s32.totalorder %s15, 3
      %p159 = pnand %p157, %p158
      %p160 = pneg %p159
      // Predicated region
      $region25: #{tpu_custom_call.1} parent=5 // pred_check
        _
      $region26: #{tpu_custom_call.1} parent=5 // pred_check_branch
        %162 = sbr.rel (%p159) target = $region28
      $region27: #{tpu_custom_call.1} parent=5 // pred_region
        %s163 = ssub.s32 %s15, 1
        %s164 = sand.u32 %s42, 1
        %s165 = scalar_lea.sflag [#allocation3], %s164
        %s166 = sand.u32 %s42, 1
        %s167 = smul.addr %s166, 8
        %s168 = scalar_lea.vmem [#allocation2], %s167
        // Predicated region
        $region29: #{tpu_custom_call.1} parent=27 // pred_check
          %p169 = pneg %p55
        $region30: #{tpu_custom_call.1} parent=27 // pred_check_branch
          %171 = sbr.rel (%p169) target = $region32
        $region31: #{tpu_custom_call.1} parent=27 // pred_region
          %172 = dma.done %s165, 128
        $region32: #{tpu_custom_call.1} parent=27 // pred_fallthru
          _
        // Predicated region
        $region33: #{tpu_custom_call.1} parent=27 // pred_check
          %p173 = pneg %p76
        $region34: #{tpu_custom_call.1} parent=27 // pred_check_branch
          %175 = sbr.rel (%p173) target = $region36
        $region35: #{tpu_custom_call.1} parent=27 // pred_region
          %176 = dma.done [#allocation6], 8192
        $region36: #{tpu_custom_call.1} parent=27 // pred_fallthru
          _
        %s177 = sand.u32 %s42, 1
        %s178 = scalar_lea.sflag [#allocation3], %s177
        %s179 = sand.u32 %s42, 1
        %s180 = smul.addr %s179, 8
        %s181 = scalar_lea.vmem [#allocation2], %s180
        %p182 = pneg %p55
        %p183 = pneg %p52
        %p184 = pneg %p76
        %p185 = pneg %p73
        %p186 = pneg %p104
        %p187 = pneg %p101
        %s188 = sand.u32 %s91, 1
        %s189 = scalar_lea.sflag [#allocation4], %s188
        %s190 = sand.u32 %s91, 1
        %s191 = smul.addr %s190, 4
        %s192 = scalar_lea.vmem [#allocation7], %s191
        %s193 = smul.u32 2, %s24
        %v194 = vld [vmem:[%s168] sm:$0xff]
        %v195 = vld [vmem:[#allocation5] sm:$0xff]
        %v196 = vld [vmem:[#allocation5 + $0x8] sm:$0xff]
        %v197 = vld [vmem:[#allocation5 + $0x10] sm:$0xff]
        %v198 = vld [vmem:[#allocation5 + $0x18] sm:$0xff]
        %v199 = vld [vmem:[#allocation5 + $0x20] sm:$0xff]
        %v200 = vld [vmem:[#allocation5 + $0x28] sm:$0xff]
        %v201 = vld [vmem:[#allocation5 + $0x30] sm:$0xff]
        %v202 = vld [vmem:[#allocation5 + $0x38] sm:$0xff]
        %v203 = vld [vmem:[#allocation5 + $0x40] sm:$0xff]
        %v204 = vld [vmem:[#allocation5 + $0x48] sm:$0xff]
        %v205 = vld [vmem:[#allocation5 + $0x50] sm:$0xff]
        %v206 = vld [vmem:[#allocation5 + $0x58] sm:$0xff]
        %v207 = vld [vmem:[#allocation5 + $0x60] sm:$0xff]
        %v208 = vld [vmem:[#allocation5 + $0x68] sm:$0xff]
        %v209 = vld [vmem:[#allocation5 + $0x70] sm:$0xff]
        %v210 = vld [vmem:[#allocation5 + $0x78] sm:$0xff]
        %v211 = vld [vmem:[#allocation5 + $0x80] sm:$0xff]
        %v212 = vld [vmem:[#allocation5 + $0x88] sm:$0xff]
        %v213 = vld [vmem:[#allocation5 + $0x90] sm:$0xff]
        %v214 = vld [vmem:[#allocation5 + $0x98] sm:$0xff]
        %v215 = vld [vmem:[#allocation5 + $0xa0] sm:$0xff]
        %v216 = vld [vmem:[#allocation5 + $0xa8] sm:$0xff]
        %v217 = vld [vmem:[#allocation5 + $0xb0] sm:$0xff]
        %v218 = vld [vmem:[#allocation5 + $0xb8] sm:$0xff]
        %v219 = vld [vmem:[#allocation5 + $0xc0] sm:$0xff]
        %v220 = vld [vmem:[#allocation5 + $0xc8] sm:$0xff]
        %v221 = vld [vmem:[#allocation5 + $0xd0] sm:$0xff]
        %v222 = vld [vmem:[#allocation5 + $0xd8] sm:$0xff]
        %v223 = vld [vmem:[#allocation5 + $0xe0] sm:$0xff]
        %v224 = vld [vmem:[#allocation5 + $0xe8] sm:$0xff]
        %v225 = vld [vmem:[#allocation5 + $0xf0] sm:$0xff]
        %v226 = vld [vmem:[#allocation5 + $0xf8] sm:$0xff]
        %v227 = vld [vmem:[#allocation5 + $0x100] sm:$0xff]
        %v228 = vld [vmem:[#allocation5 + $0x108] sm:$0xff]
        %v229 = vld [vmem:[#allocation5 + $0x110] sm:$0xff]
        %v230 = vld [vmem:[#allocation5 + $0x118] sm:$0xff]
        %v231 = vld [vmem:[#allocation5 + $0x120] sm:$0xff]
        %v232 = vld [vmem:[#allocation5 + $0x128] sm:$0xff]
        %v233 = vld [vmem:[#allocation5 + $0x130] sm:$0xff]
        %v234 = vld [vmem:[#allocation5 + $0x138] sm:$0xff]
        %v235 = vld [vmem:[#allocation5 + $0x140] sm:$0xff]
        %v236 = vld [vmem:[#allocation5 + $0x148] sm:$0xff]
        %v237 = vld [vmem:[#allocation5 + $0x150] sm:$0xff]
        %v238 = vld [vmem:[#allocation5 + $0x158] sm:$0xff]
        %v239 = vld [vmem:[#allocation5 + $0x160] sm:$0xff]
        %v240 = vld [vmem:[#allocation5 + $0x168] sm:$0xff]
        %v241 = vld [vmem:[#allocation5 + $0x170] sm:$0xff]
        %v242 = vld [vmem:[#allocation5 + $0x178] sm:$0xff]
        %v243 = vld [vmem:[#allocation5 + $0x180] sm:$0xff]
        %v244 = vld [vmem:[#allocation5 + $0x188] sm:$0xff]
        %v245 = vld [vmem:[#allocation5 + $0x190] sm:$0xff]
        %v246 = vld [vmem:[#allocation5 + $0x198] sm:$0xff]
        %v247 = vld [vmem:[#allocation5 + $0x1a0] sm:$0xff]
        %v248 = vld [vmem:[#allocation5 + $0x1a8] sm:$0xff]
        %v249 = vld [vmem:[#allocation5 + $0x1b0] sm:$0xff]
        %v250 = vld [vmem:[#allocation5 + $0x1b8] sm:$0xff]
        %v251 = vld [vmem:[#allocation5 + $0x1c0] sm:$0xff]
        %v252 = vld [vmem:[#allocation5 + $0x1c8] sm:$0xff]
        %v253 = vld [vmem:[#allocation5 + $0x1d0] sm:$0xff]
        %v254 = vld [vmem:[#allocation5 + $0x1d8] sm:$0xff]
        %v255 = vld [vmem:[#allocation5 + $0x1e0] sm:$0xff]
        %v256 = vld [vmem:[#allocation5 + $0x1e8] sm:$0xff]
        %v257 = vld [vmem:[#allocation5 + $0x1f0] sm:$0xff]
        %v258 = vld [vmem:[#allocation5 + $0x1f8] sm:$0xff]
        %v260 = vcombine.high %v194, %v194
        %v262 = vunpack.c.l.s4 1983009808
        %v263 = vunpack.c.0.s8 %v262
        %v264 = vlaneseq
        %v265 = vshrl.u32 %v264, 7
        %v266 = vsub.s32 %v263, %v265
        %v267 = vrot.slane %v194, %v266
        %v269 = vunpack.c.l.s4 1983009808
        %v270 = vunpack.c.0.s8 %v269
        %v271 = vlaneseq
        %v272 = vshrl.u32 %v271, 7
        %v273 = vsub.s32 %v270, %v272
        %v274 = vrot.slane %v260, %v273
        %v275 = vcombine.high %v267, %v267
        %v276 = vcombine.high %v274, %v274
        %281 = vmatprep.subr.mxu0 0.0
        %282 = vmatpush1.msra.mxu0 %v195
        %283 = vmatprep.subr.mxu0 0.0
        %284 = vmatpush1.msra.mxu0 %v196
        %285 = vmatprep.subr.mxu0 0.0
        %286 = vmatpush1.msra.mxu0 %v197
        %287 = vmatprep.subr.mxu0 0.0
        %288 = vmatpush1.msra.mxu0 %v198
        %289 = vmatprep.subr.mxu0 0.0
        %290 = vmatpush1.msra.mxu0 %v199
        %291 = vmatprep.subr.mxu0 0.0
        %292 = vmatpush1.msra.mxu0 %v200
        %293 = vmatprep.subr.mxu0 0.0
        %294 = vmatpush1.msra.mxu0 %v201
        %295 = vmatprep.subr.mxu0 0.0
        %296 = vmatpush1.msra.mxu0 %v202
        %297 = vmatprep.subr.mxu0 0.0
        %298 = vmatpush1.msra.mxu0 %v203
        %299 = vmatprep.subr.mxu0 0.0
        %300 = vmatpush1.msra.mxu0 %v204
        %301 = vmatprep.subr.mxu0 0.0
        %302 = vmatpush1.msra.mxu0 %v205
        %303 = vmatprep.subr.mxu0 0.0
        %304 = vmatpush1.msra.mxu0 %v206
        %305 = vmatprep.subr.mxu0 0.0
        %306 = vmatpush1.msra.mxu0 %v207
        %307 = vmatprep.subr.mxu0 0.0
        %308 = vmatpush1.msra.mxu0 %v208
        %309 = vmatprep.subr.mxu0 0.0
        %310 = vmatpush1.msra.mxu0 %v209
        %311 = vmatprep.subr.mxu0 0.0
        %312 = vmatpush1.msra.mxu0 %v210
        %313 = vmatprep.subr.mxu0 0.0
        %314 = vmatpush1.msra.mxu0 %v211
        %315 = vmatprep.subr.mxu0 0.0
        %316 = vmatpush1.msra.mxu0 %v212
        %317 = vmatprep.subr.mxu0 0.0
        %318 = vmatpush1.msra.mxu0 %v213
        %319 = vmatprep.subr.mxu0 0.0
        %320 = vmatpush1.msra.mxu0 %v214
        %321 = vmatprep.subr.mxu0 0.0
        %322 = vmatpush1.msra.mxu0 %v215
        %323 = vmatprep.subr.mxu0 0.0
        %324 = vmatpush1.msra.mxu0 %v216
        %325 = vmatprep.subr.mxu0 0.0
        %326 = vmatpush1.msra.mxu0 %v217
        %327 = vmatprep.subr.mxu0 0.0
        %328 = vmatpush1.msra.mxu0 %v218
        %329 = vmatprep.subr.mxu0 0.0
        %330 = vmatpush1.msra.mxu0 %v219
        %331 = vmatprep.subr.mxu0 0.0
        %332 = vmatpush1.msra.mxu0 %v220
        %333 = vmatprep.subr.mxu0 0.0
        %334 = vmatpush1.msra.mxu0 %v221
        %335 = vmatprep.subr.mxu0 0.0
        %336 = vmatpush1.msra.mxu0 %v222
        %337 = vmatprep.subr.mxu0 0.0
        %338 = vmatpush1.msra.mxu0 %v223
        %339 = vmatprep.subr.mxu0 0.0
        %340 = vmatpush1.msra.mxu0 %v224
        %341 = vmatprep.subr.mxu0 0.0
        %342 = vmatpush1.msra.mxu0 %v225
        %343 = vmatprep.subr.mxu0 0.0
        %344 = vmatpush1.msra.mxu0 %v226
        %345 = vmatprep.mubr.f32.mxu0 %v275
        %346 = vmatmul.mubr.f32.gmra.mrb[0].mxu0 %v267
        %v347 = vpop.f32.mrb[0].mxu0
        %v348 = vadd.f32 0.0, %v347
        %v349 = vpop.f32.mrb[0].mxu0
        %350 = vdwg.mxu0
        %351 = vmatprep.subr.mxu0 0.0
        %352 = vmatpush1.msra.mxu0 %v227
        %353 = vmatprep.subr.mxu0 0.0
        %354 = vmatpush1.msra.mxu0 %v228
        %355 = vmatprep.subr.mxu0 0.0
        %356 = vmatpush1.msra.mxu0 %v229
        %357 = vmatprep.subr.mxu0 0.0
        %358 = vmatpush1.msra.mxu0 %v230
        %359 = vmatprep.subr.mxu0 0.0
        %360 = vmatpush1.msra.mxu0 %v231
        %361 = vmatprep.subr.mxu0 0.0
        %362 = vmatpush1.msra.mxu0 %v232
        %363 = vmatprep.subr.mxu0 0.0
        %364 = vmatpush1.msra.mxu0 %v233
        %365 = vmatprep.subr.mxu0 0.0
        %366 = vmatpush1.msra.mxu0 %v234
        %367 = vmatprep.subr.mxu0 0.0
        %368 = vmatpush1.msra.mxu0 %v235
        %369 = vmatprep.subr.mxu0 0.0
        %370 = vmatpush1.msra.mxu0 %v236
        %371 = vmatprep.subr.mxu0 0.0
        %372 = vmatpush1.msra.mxu0 %v237
        %373 = vmatprep.subr.mxu0 0.0
        %374 = vmatpush1.msra.mxu0 %v238
        %375 = vmatprep.subr.mxu0 0.0
        %376 = vmatpush1.msra.mxu0 %v239
        %377 = vmatprep.subr.mxu0 0.0
        %378 = vmatpush1.msra.mxu0 %v240
        %379 = vmatprep.subr.mxu0 0.0
        %380 = vmatpush1.msra.mxu0 %v241
        %381 = vmatprep.subr.mxu0 0.0
        %382 = vmatpush1.msra.mxu0 %v242
        %383 = vmatprep.subr.mxu0 0.0
        %384 = vmatpush1.msra.mxu0 %v243
        %385 = vmatprep.subr.mxu0 0.0
        %386 = vmatpush1.msra.mxu0 %v244
        %387 = vmatprep.subr.mxu0 0.0
        %388 = vmatpush1.msra.mxu0 %v245
        %389 = vmatprep.subr.mxu0 0.0
        %390 = vmatpush1.msra.mxu0 %v246
        %391 = vmatprep.subr.mxu0 0.0
        %392 = vmatpush1.msra.mxu0 %v247
        %393 = vmatprep.subr.mxu0 0.0
        %394 = vmatpush1.msra.mxu0 %v248
        %395 = vmatprep.subr.mxu0 0.0
        %396 = vmatpush1.msra.mxu0 %v249
        %397 = vmatprep.subr.mxu0 0.0
        %398 = vmatpush1.msra.mxu0 %v250
        %399 = vmatprep.subr.mxu0 0.0
        %400 = vmatpush1.msra.mxu0 %v251
        %401 = vmatprep.subr.mxu0 0.0
        %402 = vmatpush1.msra.mxu0 %v252
        %403 = vmatprep.subr.mxu0 0.0
        %404 = vmatpush1.msra.mxu0 %v253
        %405 = vmatprep.subr.mxu0 0.0
        %406 = vmatpush1.msra.mxu0 %v254
        %407 = vmatprep.subr.mxu0 0.0
        %408 = vmatpush1.msra.mxu0 %v255
        %409 = vmatprep.subr.mxu0 0.0
        %410 = vmatpush1.msra.mxu0 %v256
        %411 = vmatprep.subr.mxu0 0.0
        %412 = vmatpush1.msra.mxu0 %v257
        %413 = vmatprep.subr.mxu0 0.0
        %414 = vmatpush1.msra.mxu0 %v258
        %415 = vmatprep.mubr.f32.mxu0 %v276
        %416 = vmatmul.mubr.f32.gmra.mrb[0].mxu0 %v274
        %v417 = vpop.f32.mrb[0].mxu0
        %v418 = vadd.f32 %v348, %v417
        %v419 = vpop.f32.mrb[0].mxu0
        %420 = vdwg.mxu0
        %v421 = vmul.f32 %v418, 0.25
        %422 = vst [vmem:[%s192] sm:$0x3] %v421
        %s423 = scalar_lea.vmem %s192, 2 [#allocation7]
        %424 = vst [vmem:[%s423] sm:$0x3] 0.0
        %s425 = sand.u32 %s91, 1
        %s426 = scalar_lea.sflag [#allocation4], %s425
        %s427 = sand.u32 %s91, 1
        %s428 = smul.addr %s427, 4
        %s429 = scalar_lea.vmem [#allocation7], %s428
        // Predicated region
        $region37: #{tpu_custom_call.1} parent=27 // pred_check
          %p430 = pneg %p101
        $region38: #{tpu_custom_call.1} parent=27 // pred_check_branch
          %432 = sbr.rel (%p430) target = $region40
        $region39: #{tpu_custom_call.1} parent=27 // pred_region
          %s433 = smul.u32 2, %s24
          %s435 = ssub.s32 64, 64
          %436 = vsyncadd %s426, %s435
          %s437 = sadd.s32 %s25, %s433
          %s438 = smul.addr %s437, 32
          %s439 = scalar_lea.hbm %s2, %s438
          %s440 = sshll.u32 %s429, 4
          %s441 = int_to_ptr.vmem [resolvable:$true] %s440
          %446 = dma.vmem_to_hbm [thread:$0]  %s441, 64, %s439, %s426, 32, 32, 2
        $region40: #{tpu_custom_call.1} parent=27 // pred_fallthru
          _
      $region28: #{tpu_custom_call.1} parent=5 // pred_fallthru
        _
      %p447 = scmp.le.s32.totalorder 2, %s15
      // Predicated region
      $region41: #{tpu_custom_call.1} parent=5 // pred_check
        %p448 = pneg %p447
      $region42: #{tpu_custom_call.1} parent=5 // pred_check_branch
        %450 = sbr.rel (%p448) target = $region44
      $region43: #{tpu_custom_call.1} parent=5 // pred_region
        %s451 = ssub.s32 %s15, 2
        // Predicated region
        $region45: #{tpu_custom_call.1} parent=43 // pred_check
          %p452 = pneg %p107
        $region46: #{tpu_custom_call.1} parent=43 // pred_check_branch
          %454 = sbr.rel (%p452) target = $region48
        $region47: #{tpu_custom_call.1} parent=43 // pred_region
          %s455 = sand.u32 %s92, 1
          %s456 = scalar_lea.sflag [#allocation4], %s455
          %s457 = sand.u32 %s92, 1
          %s458 = smul.addr %s457, 4
          %s459 = scalar_lea.vmem [#allocation7], %s458
          %460 = dma.done %s456, 64
        $region48: #{tpu_custom_call.1} parent=43 // pred_fallthru
          _
      $region44: #{tpu_custom_call.1} parent=5 // pred_fallthru
        _
    $region6: #{tpu_custom_call.1} parent=1 // loop_footer
      %s19 = sadd.s32 1, %s15
    $region7: #{tpu_custom_call.1} parent=1 // loop_footer_branch
      %14 = sbr.rel target = $region3
    $region8: #{tpu_custom_call.1} parent=1 // loop_exit
      _
    %461 = vsyncpa [#allocation3], 1
    %s462 = scalar_lea.sflag [#allocation3], 1
    %463 = vsyncpa %s462, 1
    %464 = vsyncpa [#allocation6], 1
    %465 = vsyncpa [#allocation4], 1
    %s466 = scalar_lea.sflag [#allocation4], 1
    %467 = vsyncpa %s466, 1

</llo_original>
